<compile_context>
chip_gen: v6e
topology: v6e:2x2x1
jax: 0.10.0
libtpu: 0.0.40
codegen_flags: <defaults>
</compile_context>

<pallas_src>
import jax
import jax.numpy as jnp
from jax.experimental import pallas as pl
from jax.experimental.pallas import tpu as pltpu

INPUT_DIM = 32
H1, H2, H3, H4 = 256, 128, 64, 32
LANE = 128


def _silu(x):
    # SiLU / swish: x * sigmoid(x)  (sigmoid lowers to the EUP)
    return x * jax.nn.sigmoid(x)


def _make_kernel(n_chunks, chunk, ew_dtype):
    """Kernel factory; n_chunks/chunk/ew_dtype are static (baked into the trace)."""

    def kernel(x_ref, w1_ref, w2_ref, b2_ref, w3_ref, b3_ref, w4_ref, b4_ref, o_ref):
        w1 = w1_ref[...]              # (H1, D+1)  fc1 bias folded into last column
        w2 = w2_ref[...]              # (H2, H1)
        w3 = w3_ref[...]              # (H3, H2)
        w4 = w4_ref[...]              # (H4, H3)
        mm_dtype = w2.dtype
        # Hoist bias lane-broadcasts out of the chunk loop (JAX does not CSE
        # broadcast_in_dim, so building them per chunk would repeat the work).
        b2 = jnp.broadcast_to(b2_ref[...].astype(ew_dtype), (H2, chunk))
        b3 = jnp.broadcast_to(b3_ref[...].astype(ew_dtype), (H3, chunk))
        b4 = jnp.broadcast_to(b4_ref[...], (H4, chunk))       # final layer in f32

        # Fully-unrolled static chunk loop over the lane (batch) axis of the
        # tile (n_chunks <= 4): static slice offsets, small per-chunk live set.
        for c in range(n_chunks):
            sl = pl.ds(c * chunk, chunk)
            h = x_ref[:, sl]                                               # (D+1, chunk)
            h = jnp.dot(w1, h, preferred_element_type=jnp.float32)        # bias folded
            h = _silu(h.astype(ew_dtype))                                  # (H1, chunk)
            h = jnp.dot(w2, h.astype(mm_dtype), preferred_element_type=jnp.float32)
            h = _silu(h.astype(ew_dtype) + b2)                             # (H2, chunk)
            h = jnp.dot(w3, h.astype(mm_dtype), preferred_element_type=jnp.float32)
            h = _silu(h.astype(ew_dtype) + b3)                             # (H3, chunk)
            h = jnp.dot(w4, h.astype(mm_dtype), preferred_element_type=jnp.float32)
            h = h + b4                                                     # (H4, chunk) f32
            o_ref[:, sl] = h.astype(o_ref.dtype)

    return kernel


def _default_elementwise_dtype(compute_dtype):
    if jnp.dtype(compute_dtype) == jnp.dtype(jnp.float32):
        return jnp.float32
    try:
        kind = jax.devices()[0].device_kind.lower()
    except Exception:
        return jnp.bfloat16
    # v5e and older have no bf16 VPU/EUP: bf16 elementwise math gains nothing
    # there, so keep SiLU / bias adds in f32.
    if any(tag in kind for tag in ("v2", "v3", "v4", "v5")):
        return jnp.float32
    return jnp.bfloat16


def _choose_batch_tile(Bp, batch_tile, chunk):
    """Bp is a multiple of 128. Returns a lane tile that is a multiple of 128
    (and of `chunk` when >= chunk), targeting >= 4 grid steps once Bp >= 512 so
    both v7x TensorCores get >= 2 steps each (per-core double buffering)."""
    tb = min(batch_tile, Bp)
    if Bp >= 4 * LANE:
        tb = min(tb, max(LANE, (Bp // 4 // LANE) * LANE))
    tb = max(LANE, (tb // LANE) * LANE)
    if tb >= chunk:
        tb = (tb // chunk) * chunk
    return tb


def feature_extractor_t(xt, params, *, batch_tile=1024, chunk=256,
                        compute_dtype=jnp.bfloat16, elementwise_dtype=None):
    """Core entry point in the lane-dense (features, batch) layout.

    xt: (INPUT_DIM, B). Returns (H4, B) float32. Callers that can produce /
    consume this layout directly avoid the x.T / out.T HBM passes of
    `feature_extractor`.
    """
    D, B = xt.shape
    assert D == INPUT_DIM
    if elementwise_dtype is None:
        elementwise_dtype = _default_elementwise_dtype(compute_dtype)

    # Pad the batch up to a multiple of 128 (lane width) so every block is
    # lane-dense; padded columns are zeros and are sliced off at the end.
    Bp = ((B + LANE - 1) // LANE) * LANE
    tb = _choose_batch_tile(Bp, batch_tile, chunk)
    chunk_eff = min(chunk, tb)
    if tb % chunk_eff != 0:          # tb is always a multiple of 128
        chunk_eff = LANE
    n_chunks = tb // chunk_eff
    grid = (pl.cdiv(Bp, tb),)

    xt = xt.astype(compute_dtype)
    if Bp != B:
        xt = jnp.pad(xt, ((0, 0), (0, Bp - B)))
    # Fold fc1's bias into the matmul: ones row on x, bias column on W1.
    x_aug = jnp.concatenate([xt, jnp.ones((1, Bp), compute_dtype)], axis=0)   # (D+1, Bp)
    w1 = jnp.concatenate([params["w1"], params["b1"].reshape(-1, 1)],
                         axis=1).astype(compute_dtype)                        # (H1, D+1)
    w2 = params["w2"].astype(compute_dtype)
    w3 = params["w3"].astype(compute_dtype)
    w4 = params["w4"].astype(compute_dtype)
    b2 = params["b2"].astype(jnp.float32).reshape(-1, 1)
    b3 = params["b3"].astype(jnp.float32).reshape(-1, 1)
    b4 = params["b4"].astype(jnp.float32).reshape(-1, 1)

    def const_spec(arr):
        # Whole array, same block index every grid step -> fetched once, resident.
        return pl.BlockSpec(arr.shape, lambda i: (0, 0))

    in_specs = [pl.BlockSpec((D + 1, tb), lambda i: (0, i)),
                const_spec(w1), const_spec(w2), const_spec(b2),
                const_spec(w3), const_spec(b3), const_spec(w4), const_spec(b4)]
    out_spec = pl.BlockSpec((H4, tb), lambda i: (0, i))

    flops = 2 * Bp * ((D + 1) * H1 + H1 * H2 + H2 * H3 + H3 * H4)
    transcendentals = Bp * (H1 + H2 + H3)                       # sigmoids
    bytes_accessed = (x_aug.size * x_aug.dtype.itemsize + Bp * H4 * 4
                      + sum(a.size * a.dtype.itemsize for a in (w1, w2, w3, w4))
                      + (H2 + H3 + H4) * 4)

    out_t = pl.pallas_call(
        _make_kernel(n_chunks, chunk_eff, elementwise_dtype),
        out_shape=jax.ShapeDtypeStruct((H4, Bp), jnp.float32),
        grid_spec=pltpu.PrefetchScalarGridSpec(
            num_scalar_prefetch=0,
            grid=grid,
            in_specs=in_specs,
            out_specs=out_spec,
        ),
        compiler_params=pltpu.CompilerParams(
            dimension_semantics=("parallel",),
            vmem_limit_bytes=8 * 1024 * 1024,
        ),
        cost_estimate=pl.CostEstimate(
            flops=flops,
            transcendentals=transcendentals,
            bytes_accessed=bytes_accessed),
    )(x_aug, w1, w2, b2, w3, b3, w4, b4)

    return out_t[:, :B] if Bp != B else out_t


def feature_extractor(x, params, **kwargs):
    """PyTorch-equivalent API: x (B, INPUT_DIM) float32 -> (B, 32) float32."""
    out_t = feature_extractor_t(x.T, params, **kwargs)
    return out_t.T


def init_params(key):
    """Deterministic synthetic parameters in PyTorch-native layout.

    nn.Linear default init: U(-1/sqrt(fan_in), 1/sqrt(fan_in)); w:(out,in), b:(out,).
    """
    dims = [(INPUT_DIM, H1), (H1, H2), (H2, H3), (H3, H4)]
    params = {}
    keys = jax.random.split(key, 2 * len(dims))
    for n, (fin, fout) in enumerate(dims):
        bound = 1.0 / jnp.sqrt(float(fin))
        params[f"w{n + 1}"] = jax.random.uniform(
            keys[2 * n], (fout, fin), jnp.float32, -bound, bound)
        params[f"b{n + 1}"] = jax.random.uniform(
            keys[2 * n + 1], (fout,), jnp.float32, -bound, bound)
    return params


def reference(x, params):
    h = x
    for n in range(1, 4):
        h = jax.nn.silu(jnp.dot(h, params[f"w{n}"].T, precision="highest")
                        + params[f"b{n}"])
    return jnp.dot(h, params["w4"].T, precision="highest") + params["b4"]


if __name__ == "__main__":
    key = jax.random.PRNGKey(0)
    kp, kx = jax.random.split(key)
    params = init_params(kp)

    # 1) Small batch, f32 matmuls + f32 elementwise: checks the math / layout /
    #    folded fc1 bias (tolerance covers MXU pass-decomposition vs XLA ref).
    B = 8
    x = jax.random.normal(kx, (B, INPUT_DIM), jnp.float32)
    ref = reference(x, params)
    out_f32 = jax.block_until_ready(
        feature_extractor(x, params, compute_dtype=jnp.float32,
                          elementwise_dtype=jnp.float32))
    assert out_f32.shape == (B, H4)
    assert jnp.allclose(out_f32, ref, atol=1e-2, rtol=1e-2), "f32 path mismatch"

    # 2) Default path (bf16 matmuls, auto elementwise dtype), batch not a
    #    multiple of 128: exercises the zero-pad + multi-step grid path.
    B2 = 600
    x2 = jax.random.normal(jax.random.PRNGKey(1), (B2, INPUT_DIM), jnp.float32)
    out2 = jax.block_until_ready(feature_extractor(x2, params))
    ref2 = reference(x2, params)
    assert out2.shape == (B2, H4)
    assert jnp.allclose(out2, ref2, atol=5e-2, rtol=5e-2), "padded bf16 path mismatch"

    # 3) Larger batch: 4 grid steps of tb=1024 with the in-kernel 4x256-lane
    #    chunk loop.
    B3 = 4096
    x3 = jax.random.normal(jax.random.PRNGKey(2), (B3, INPUT_DIM), jnp.float32)
    out3 = jax.block_until_ready(feature_extractor(x3, params))
    ref3 = reference(x3, params)
    assert out3.shape == (B3, H4)
    assert jnp.allclose(out3, ref3, atol=5e-2, rtol=5e-2), "tiled bf16 path mismatch"

    print("KERNEL_OK")
</pallas_src>

<mosaic_0001>
module attributes {stable_mosaic.version = 11 : i64} {
  func.func @kernel(%arg0: i32, %arg1: memref<33x128xf32, #tpu.memory_space<vmem>>, %arg2: memref<256x33xf32, #tpu.memory_space<vmem>>, %arg3: memref<128x256xf32, #tpu.memory_space<vmem>>, %arg4: memref<128x1xf32, #tpu.memory_space<vmem>>, %arg5: memref<64x128xf32, #tpu.memory_space<vmem>>, %arg6: memref<64x1xf32, #tpu.memory_space<vmem>>, %arg7: memref<32x64xf32, #tpu.memory_space<vmem>>, %arg8: memref<32x1xf32, #tpu.memory_space<vmem>>, %arg9: memref<32x128xf32, #tpu.memory_space<vmem>>) attributes {dimension_semantics = [#tpu.dimension_semantics<parallel>], iteration_bounds = array<i64: 1>, scalar_prefetch = 0 : i64, scratch_operands = 0 : i64, tpu.core_type = #tpu.core_type<tc>, window_params = [{transform_indices = @transform_0, window_bounds = array<i64: 33, 128>}, {pipeline_mode = #tpu.pipeline_mode<synchronous>, transform_indices = @transform_1, window_bounds = array<i64: 256, 33>}, {pipeline_mode = #tpu.pipeline_mode<synchronous>, transform_indices = @transform_2, window_bounds = array<i64: 128, 256>}, {pipeline_mode = #tpu.pipeline_mode<synchronous>, transform_indices = @transform_3, window_bounds = array<i64: 128, 1>}, {pipeline_mode = #tpu.pipeline_mode<synchronous>, transform_indices = @transform_4, window_bounds = array<i64: 64, 128>}, {pipeline_mode = #tpu.pipeline_mode<synchronous>, transform_indices = @transform_5, window_bounds = array<i64: 64, 1>}, {pipeline_mode = #tpu.pipeline_mode<synchronous>, transform_indices = @transform_6, window_bounds = array<i64: 32, 64>}, {pipeline_mode = #tpu.pipeline_mode<synchronous>, transform_indices = @transform_7, window_bounds = array<i64: 32, 1>}, {transform_indices = @transform_8, window_bounds = array<i64: 32, 128>}]} {
    %c0 = arith.constant 0 : index
    %c0_0 = arith.constant 0 : index
    %0 = vector.load %arg2[%c0, %c0_0] : memref<256x33xf32, #tpu.memory_space<vmem>>, vector<256x33xf32>
    %c0_1 = arith.constant 0 : index
    %c0_2 = arith.constant 0 : index
    %1 = vector.load %arg3[%c0_1, %c0_2] : memref<128x256xf32, #tpu.memory_space<vmem>>, vector<128x256xf32>
    %c0_3 = arith.constant 0 : index
    %c0_4 = arith.constant 0 : index
    %2 = vector.load %arg5[%c0_3, %c0_4] : memref<64x128xf32, #tpu.memory_space<vmem>>, vector<64x128xf32>
    %c0_5 = arith.constant 0 : index
    %c0_6 = arith.constant 0 : index
    %3 = vector.load %arg7[%c0_5, %c0_6] : memref<32x64xf32, #tpu.memory_space<vmem>>, vector<32x64xf32>
    %c0_7 = arith.constant 0 : index
    %c0_8 = arith.constant 0 : index
    %4 = vector.load %arg4[%c0_7, %c0_8] : memref<128x1xf32, #tpu.memory_space<vmem>>, vector<128x1xf32>
    %5 = vector.shape_cast %4 : vector<128x1xf32> to vector<128x1xf32>
    %6 = vector.broadcast %5 : vector<128x1xf32> to vector<128x128xf32>
    %c0_9 = arith.constant 0 : index
    %c0_10 = arith.constant 0 : index
    %7 = vector.load %arg6[%c0_9, %c0_10] : memref<64x1xf32, #tpu.memory_space<vmem>>, vector<64x1xf32>
    %8 = vector.shape_cast %7 : vector<64x1xf32> to vector<64x1xf32>
    %9 = vector.broadcast %8 : vector<64x1xf32> to vector<64x128xf32>
    %c0_11 = arith.constant 0 : index
    %c0_12 = arith.constant 0 : index
    %10 = vector.load %arg8[%c0_11, %c0_12] : memref<32x1xf32, #tpu.memory_space<vmem>>, vector<32x1xf32>
    %11 = vector.shape_cast %10 : vector<32x1xf32> to vector<32x1xf32>
    %12 = vector.broadcast %11 : vector<32x1xf32> to vector<32x128xf32>
    %c0_13 = arith.constant 0 : index
    %c0_14 = arith.constant 0 : index
    %13 = vector.load %arg1[%c0_13, %c0_14] : memref<33x128xf32, #tpu.memory_space<vmem>>, vector<33x128xf32>
    %cst = arith.constant dense<0.000000e+00> : vector<256x128xf32>
    %14 = tpu.matmul %0, %13, %cst {dimension_numbers = #tpu.dot_dimension_numbers<[1], [0], [0], [1], [0, 0, 1, 1], [], []>} : vector<256x33xf32>, vector<33x128xf32>, vector<256x128xf32> -> vector<256x128xf32>
    %15 = arith.negf %14 : vector<256x128xf32>
    %16 = math.exp %15 : vector<256x128xf32>
    %cst_15 = arith.constant 1.000000e+00 : f32
    %17 = vector.broadcast %cst_15 : f32 to vector<256x128xf32>
    %18 = arith.addf %17, %16 : vector<256x128xf32>
    %19 = arith.divf %17, %18 : vector<256x128xf32>
    %20 = arith.mulf %14, %19 : vector<256x128xf32>
    %cst_16 = arith.constant dense<0.000000e+00> : vector<128x128xf32>
    %21 = tpu.matmul %1, %20, %cst_16 {dimension_numbers = #tpu.dot_dimension_numbers<[1], [0], [0], [1], [0, 0, 1, 1], [], []>} : vector<128x256xf32>, vector<256x128xf32>, vector<128x128xf32> -> vector<128x128xf32>
    %22 = arith.addf %21, %6 : vector<128x128xf32>
    %23 = arith.negf %22 : vector<128x128xf32>
    %24 = math.exp %23 : vector<128x128xf32>
    %cst_17 = arith.constant 1.000000e+00 : f32
    %25 = vector.broadcast %cst_17 : f32 to vector<128x128xf32>
    %26 = arith.addf %25, %24 : vector<128x128xf32>
    %27 = arith.divf %25, %26 : vector<128x128xf32>
    %28 = arith.mulf %22, %27 : vector<128x128xf32>
    %cst_18 = arith.constant dense<0.000000e+00> : vector<64x128xf32>
    %29 = tpu.matmul %2, %28, %cst_18 {dimension_numbers = #tpu.dot_dimension_numbers<[1], [0], [0], [1], [0, 0, 1, 1], [], []>} : vector<64x128xf32>, vector<128x128xf32>, vector<64x128xf32> -> vector<64x128xf32>
    %30 = arith.addf %29, %9 : vector<64x128xf32>
    %31 = arith.negf %30 : vector<64x128xf32>
    %32 = math.exp %31 : vector<64x128xf32>
    %cst_19 = arith.constant 1.000000e+00 : f32
    %33 = vector.broadcast %cst_19 : f32 to vector<64x128xf32>
    %34 = arith.addf %33, %32 : vector<64x128xf32>
    %35 = arith.divf %33, %34 : vector<64x128xf32>
    %36 = arith.mulf %30, %35 : vector<64x128xf32>
    %cst_20 = arith.constant dense<0.000000e+00> : vector<32x128xf32>
    %37 = tpu.matmul %3, %36, %cst_20 {dimension_numbers = #tpu.dot_dimension_numbers<[1], [0], [0], [1], [0, 0, 1, 1], [], []>} : vector<32x64xf32>, vector<64x128xf32>, vector<32x128xf32> -> vector<32x128xf32>
    %38 = arith.addf %37, %12 : vector<32x128xf32>
    %c0_21 = arith.constant 0 : index
    %c0_22 = arith.constant 0 : index
    %39 = vector.load %arg9[%c0_21, %c0_22] : memref<32x128xf32, #tpu.memory_space<vmem>>, vector<32x128xf32>
    tpu.vector_store %arg9[%c0_21, %c0_22], %38 {strides = array<i32>} : memref<32x128xf32, #tpu.memory_space<vmem>>, vector<32x128xf32>,
    return
  }
  func.func @transform_0(%arg0: i32) -> (i32, i32) {
    %c0_i32 = arith.constant 0 : i32
    %c0_i32_0 = arith.constant 0 : i32
    return %c0_i32, %arg0 : i32, i32
  }
  func.func @transform_1(%arg0: i32) -> (i32, i32) {
    %c0_i32 = arith.constant 0 : i32
    %c0_i32_0 = arith.constant 0 : i32
    %c0_i32_1 = arith.constant 0 : i32
    return %c0_i32, %c0_i32_0 : i32, i32
  }
  func.func @transform_2(%arg0: i32) -> (i32, i32) {
    %c0_i32 = arith.constant 0 : i32
    %c0_i32_0 = arith.constant 0 : i32
    %c0_i32_1 = arith.constant 0 : i32
    return %c0_i32, %c0_i32_0 : i32, i32
  }
  func.func @transform_3(%arg0: i32) -> (i32, i32) {
    %c0_i32 = arith.constant 0 : i32
    %c0_i32_0 = arith.constant 0 : i32
    %c0_i32_1 = arith.constant 0 : i32
    return %c0_i32, %c0_i32_0 : i32, i32
  }
  func.func @transform_4(%arg0: i32) -> (i32, i32) {
    %c0_i32 = arith.constant 0 : i32
    %c0_i32_0 = arith.constant 0 : i32
    %c0_i32_1 = arith.constant 0 : i32
    return %c0_i32, %c0_i32_0 : i32, i32
  }
  func.func @transform_5(%arg0: i32) -> (i32, i32) {
    %c0_i32 = arith.constant 0 : i32
    %c0_i32_0 = arith.constant 0 : i32
    %c0_i32_1 = arith.constant 0 : i32
    return %c0_i32, %c0_i32_0 : i32, i32
  }
  func.func @transform_6(%arg0: i32) -> (i32, i32) {
    %c0_i32 = arith.constant 0 : i32
    %c0_i32_0 = arith.constant 0 : i32
    %c0_i32_1 = arith.constant 0 : i32
    return %c0_i32, %c0_i32_0 : i32, i32
  }
  func.func @transform_7(%arg0: i32) -> (i32, i32) {
    %c0_i32 = arith.constant 0 : i32
    %c0_i32_0 = arith.constant 0 : i32
    %c0_i32_1 = arith.constant 0 : i32
    return %c0_i32, %c0_i32_0 : i32, i32
  }
  func.func @transform_8(%arg0: i32) -> (i32, i32) {
    %c0_i32 = arith.constant 0 : i32
    %c0_i32_0 = arith.constant 0 : i32
    return %c0_i32, %arg0 : i32, i32
  }
}

</mosaic_0001>

<llo_original>
// kernel: tpu_custom_call.1
$region0: #{tpu_custom_call.1}
  #allocation0 [shape = 'u32[]', space=smem, size = 0x4, offset = 0x4, fixed_abs, tag = 'smem constant byte address 0x4 - core index']
  #allocation1 [shape = 'u32[144,128]{1,0:T(1,128)}', space=vmem, size = 0x12000, scoped, tag = 'internal scratch']
  %s0 = inlined_call_operand.vmem [shape: f32[33,128], index: 0, kind: input, shape index: {}]
  %s1 = inlined_call_operand.vmem [shape: f32[256,33], index: 1, kind: input, shape index: {}]
  %s2 = inlined_call_operand.vmem [shape: f32[128,256], index: 2, kind: input, shape index: {}]
  %s3 = inlined_call_operand.vmem [shape: f32[128,1], index: 3, kind: input, shape index: {}]
  %s4 = inlined_call_operand.vmem [shape: f32[64,128], index: 4, kind: input, shape index: {}]
  %s5 = inlined_call_operand.vmem [shape: f32[64,1], index: 5, kind: input, shape index: {}]
  %s6 = inlined_call_operand.vmem [shape: f32[32,64], index: 6, kind: input, shape index: {}]
  %s7 = inlined_call_operand.vmem [shape: f32[32,1], index: 7, kind: input, shape index: {}]
  %s8 = inlined_call_operand.hbm [shape: f32[32,128], index: 8, kind: output, shape index: {}]
  %s9 = sld [smem:[#allocation0]]
  $region42: #{tpu_custom_call.1} parent=0
    _
  %s11 = ssub.s32 1, %s9
  %s12 = scalar_select 0, %s11, %s9
  $region1: #{tpu_custom_call.1} parent=0
    #allocation2 [shape = 'u8[16384]{0}', space=vmem, size = 0x4000, scoped, tag = 'output window, operand 0, single buffered']
    #allocation3 [shape = 's32[1]{0}', space=sflag, size = 0x4, scoped, tag = 'scoped memory for tpu_custom_call.1']
    %13 = vsyncpa [#allocation3], 0
    // Predicated region
    $region2: #{tpu_custom_call.1} parent=1 // pred_check
      _
    $region3: #{tpu_custom_call.1} parent=1 // pred_check_branch
      %15 = sbr.rel (0) target = $region5
    $region4: #{tpu_custom_call.1} parent=1 // pred_region
      _
    $region5: #{tpu_custom_call.1} parent=1 // pred_fallthru
      _
    // Predicated region
    $region6: #{tpu_custom_call.1} parent=1 // pred_check
      _
    $region7: #{tpu_custom_call.1} parent=1 // pred_check_branch
      %17 = sbr.rel (0) target = $region9
    $region8: #{tpu_custom_call.1} parent=1 // pred_region
      _
    $region9: #{tpu_custom_call.1} parent=1 // pred_fallthru
      _
    // Predicated region
    $region10: #{tpu_custom_call.1} parent=1 // pred_check
      _
    $region11: #{tpu_custom_call.1} parent=1 // pred_check_branch
      %19 = sbr.rel (0) target = $region13
    $region12: #{tpu_custom_call.1} parent=1 // pred_region
      _
    $region13: #{tpu_custom_call.1} parent=1 // pred_fallthru
      _
    // Predicated region
    $region14: #{tpu_custom_call.1} parent=1 // pred_check
      _
    $region15: #{tpu_custom_call.1} parent=1 // pred_check_branch
      %21 = sbr.rel (0) target = $region17
    $region16: #{tpu_custom_call.1} parent=1 // pred_region
      _
    $region17: #{tpu_custom_call.1} parent=1 // pred_fallthru
      _
    // Predicated region
    $region18: #{tpu_custom_call.1} parent=1 // pred_check
      _
    $region19: #{tpu_custom_call.1} parent=1 // pred_check_branch
      %23 = sbr.rel (0) target = $region21
    $region20: #{tpu_custom_call.1} parent=1 // pred_region
      _
    $region21: #{tpu_custom_call.1} parent=1 // pred_fallthru
      _
    // Predicated region
    $region22: #{tpu_custom_call.1} parent=1 // pred_check
      _
    $region23: #{tpu_custom_call.1} parent=1 // pred_check_branch
      %25 = sbr.rel (0) target = $region25
    $region24: #{tpu_custom_call.1} parent=1 // pred_region
      _
    $region25: #{tpu_custom_call.1} parent=1 // pred_fallthru
      _
    // Predicated region
    $region26: #{tpu_custom_call.1} parent=1 // pred_check
      _
    $region27: #{tpu_custom_call.1} parent=1 // pred_check_branch
      %27 = sbr.rel (0) target = $region29
    $region28: #{tpu_custom_call.1} parent=1 // pred_region
      _
    $region29: #{tpu_custom_call.1} parent=1 // pred_fallthru
      _
    // Predicated region
    $region30: #{tpu_custom_call.1} parent=1 // pred_check
      _
    $region31: #{tpu_custom_call.1} parent=1 // pred_check_branch
      %29 = sbr.rel (0) target = $region33
    $region32: #{tpu_custom_call.1} parent=1 // pred_region
      _
    $region33: #{tpu_custom_call.1} parent=1 // pred_fallthru
      _
    %v30 = vld [vmem:[%s1] sm:$0xff]
    %v31 = vld [vmem:[%s1 + $0x8] sm:$0xff]
    %v32 = vld [vmem:[%s1 + $0x10] sm:$0xff]
    %v33 = vld [vmem:[%s1 + $0x18] sm:$0xff]
    %v34 = vld [vmem:[%s1 + $0x20] sm:$0xff]
    %v35 = vld [vmem:[%s1 + $0x28] sm:$0xff]
    %v36 = vld [vmem:[%s1 + $0x30] sm:$0xff]
    %v37 = vld [vmem:[%s1 + $0x38] sm:$0xff]
    %v38 = vld [vmem:[%s1 + $0x40] sm:$0xff]
    %v39 = vld [vmem:[%s1 + $0x48] sm:$0xff]
    %v40 = vld [vmem:[%s1 + $0x50] sm:$0xff]
    %v41 = vld [vmem:[%s1 + $0x58] sm:$0xff]
    %v42 = vld [vmem:[%s1 + $0x60] sm:$0xff]
    %v43 = vld [vmem:[%s1 + $0x68] sm:$0xff]
    %v44 = vld [vmem:[%s1 + $0x70] sm:$0xff]
    %v45 = vld [vmem:[%s1 + $0x78] sm:$0xff]
    %v46 = vld [vmem:[%s1 + $0x80] sm:$0xff]
    %v47 = vld [vmem:[%s1 + $0x88] sm:$0xff]
    %v48 = vld [vmem:[%s1 + $0x90] sm:$0xff]
    %v49 = vld [vmem:[%s1 + $0x98] sm:$0xff]
    %v50 = vld [vmem:[%s1 + $0xa0] sm:$0xff]
    %v51 = vld [vmem:[%s1 + $0xa8] sm:$0xff]
    %v52 = vld [vmem:[%s1 + $0xb0] sm:$0xff]
    %v53 = vld [vmem:[%s1 + $0xb8] sm:$0xff]
    %v54 = vld [vmem:[%s1 + $0xc0] sm:$0xff]
    %v55 = vld [vmem:[%s1 + $0xc8] sm:$0xff]
    %v56 = vld [vmem:[%s1 + $0xd0] sm:$0xff]
    %v57 = vld [vmem:[%s1 + $0xd8] sm:$0xff]
    %v58 = vld [vmem:[%s1 + $0xe0] sm:$0xff]
    %v59 = vld [vmem:[%s1 + $0xe8] sm:$0xff]
    %v60 = vld [vmem:[%s1 + $0xf0] sm:$0xff]
    %v61 = vld [vmem:[%s1 + $0xf8] sm:$0xff]
    %v62 = vld [vmem:[%s2] sm:$0xff]
    %v63 = vld [vmem:[%s2 + $0x8] sm:$0xff]
    %v64 = vld [vmem:[%s2 + $0x10] sm:$0xff]
    %v65 = vld [vmem:[%s2 + $0x18] sm:$0xff]
    %v66 = vld [vmem:[%s2 + $0x20] sm:$0xff]
    %v67 = vld [vmem:[%s2 + $0x28] sm:$0xff]
    %v68 = vld [vmem:[%s2 + $0x30] sm:$0xff]
    %v69 = vld [vmem:[%s2 + $0x38] sm:$0xff]
    %v70 = vld [vmem:[%s2 + $0x40] sm:$0xff]
    %v71 = vld [vmem:[%s2 + $0x48] sm:$0xff]
    %v72 = vld [vmem:[%s2 + $0x50] sm:$0xff]
    %v73 = vld [vmem:[%s2 + $0x58] sm:$0xff]
    %v74 = vld [vmem:[%s2 + $0x60] sm:$0xff]
    %v75 = vld [vmem:[%s2 + $0x68] sm:$0xff]
    %v76 = vld [vmem:[%s2 + $0x70] sm:$0xff]
    %v77 = vld [vmem:[%s2 + $0x78] sm:$0xff]
    %v78 = vld [vmem:[%s2 + $0x80] sm:$0xff]
    %v79 = vld [vmem:[%s2 + $0x88] sm:$0xff]
    %v80 = vld [vmem:[%s2 + $0x90] sm:$0xff]
    %v81 = vld [vmem:[%s2 + $0x98] sm:$0xff]
    %v82 = vld [vmem:[%s2 + $0xa0] sm:$0xff]
    %v83 = vld [vmem:[%s2 + $0xa8] sm:$0xff]
    %v84 = vld [vmem:[%s2 + $0xb0] sm:$0xff]
    %v85 = vld [vmem:[%s2 + $0xb8] sm:$0xff]
    %v86 = vld [vmem:[%s2 + $0xc0] sm:$0xff]
    %v87 = vld [vmem:[%s2 + $0xc8] sm:$0xff]
    %v88 = vld [vmem:[%s2 + $0xd0] sm:$0xff]
    %v89 = vld [vmem:[%s2 + $0xd8] sm:$0xff]
    %v90 = vld [vmem:[%s2 + $0xe0] sm:$0xff]
    %v91 = vld [vmem:[%s2 + $0xe8] sm:$0xff]
    %v92 = vld [vmem:[%s2 + $0xf0] sm:$0xff]
    %v93 = vld [vmem:[%s2 + $0xf8] sm:$0xff]
    %v94 = vld [vmem:[%s4] sm:$0xff]
    %v95 = vld [vmem:[%s4 + $0x8] sm:$0xff]
    %v96 = vld [vmem:[%s4 + $0x10] sm:$0xff]
    %v97 = vld [vmem:[%s4 + $0x18] sm:$0xff]
    %v98 = vld [vmem:[%s4 + $0x20] sm:$0xff]
    %v99 = vld [vmem:[%s4 + $0x28] sm:$0xff]
    %v100 = vld [vmem:[%s4 + $0x30] sm:$0xff]
    %v101 = vld [vmem:[%s4 + $0x38] sm:$0xff]
    %v102 = vld [vmem:[%s6] sm:$0xff]
    %v103 = vld [vmem:[%s6 + $0x8] sm:$0xff]
    %v104 = vld [vmem:[%s6 + $0x10] sm:$0xff]
    %v105 = vld [vmem:[%s6 + $0x18] sm:$0xff]
    %v106 = vld [vmem:[%s3] sm:$0xff]
    %v107 = vld [vmem:[%s3 + $0x8] sm:$0xff]
    %v108 = vld [vmem:[%s3 + $0x10] sm:$0xff]
    %v109 = vld [vmem:[%s3 + $0x18] sm:$0xff]
    %v110 = vld [vmem:[%s3 + $0x20] sm:$0xff]
    %v111 = vld [vmem:[%s3 + $0x28] sm:$0xff]
    %v112 = vld [vmem:[%s3 + $0x30] sm:$0xff]
    %v113 = vld [vmem:[%s3 + $0x38] sm:$0xff]
    %v114 = vld [vmem:[%s3 + $0x40] sm:$0xff]
    %v115 = vld [vmem:[%s3 + $0x48] sm:$0xff]
    %v116 = vld [vmem:[%s3 + $0x50] sm:$0xff]
    %v117 = vld [vmem:[%s3 + $0x58] sm:$0xff]
    %v118 = vld [vmem:[%s3 + $0x60] sm:$0xff]
    %v119 = vld [vmem:[%s3 + $0x68] sm:$0xff]
    %v120 = vld [vmem:[%s3 + $0x70] sm:$0xff]
    %v121 = vld [vmem:[%s3 + $0x78] sm:$0xff]
    %123 = vset.pattern.permute.xlu0 0
    %124 = vperm.xlu0 %123, %v106
    %v125 = vpop.permute.xlu0 %124
    %128 = vset.pattern.permute.xlu0 0
    %129 = vperm.xlu0 %128, %v107
    %v130 = vpop.permute.xlu0 %129
    %133 = vset.pattern.permute.xlu0 0
    %134 = vperm.xlu0 %133, %v108
    %v135 = vpop.permute.xlu0 %134
    %138 = vset.pattern.permute.xlu0 0
    %139 = vperm.xlu0 %138, %v109
    %v140 = vpop.permute.xlu0 %139
    %143 = vset.pattern.permute.xlu0 0
    %144 = vperm.xlu0 %143, %v110
    %v145 = vpop.permute.xlu0 %144
    %148 = vset.pattern.permute.xlu0 0
    %149 = vperm.xlu0 %148, %v111
    %v150 = vpop.permute.xlu0 %149
    %153 = vset.pattern.permute.xlu0 0
    %154 = vperm.xlu0 %153, %v112
    %v155 = vpop.permute.xlu0 %154
    %158 = vset.pattern.permute.xlu0 0
    %159 = vperm.xlu0 %158, %v113
    %v160 = vpop.permute.xlu0 %159
    %163 = vset.pattern.permute.xlu0 0
    %164 = vperm.xlu0 %163, %v114
    %v165 = vpop.permute.xlu0 %164
    %168 = vset.pattern.permute.xlu0 0
    %169 = vperm.xlu0 %168, %v115
    %v170 = vpop.permute.xlu0 %169
    %173 = vset.pattern.permute.xlu0 0
    %174 = vperm.xlu0 %173, %v116
    %v175 = vpop.permute.xlu0 %174
    %178 = vset.pattern.permute.xlu0 0
    %179 = vperm.xlu0 %178, %v117
    %v180 = vpop.permute.xlu0 %179
    %183 = vset.pattern.permute.xlu0 0
    %184 = vperm.xlu0 %183, %v118
    %v185 = vpop.permute.xlu0 %184
    %188 = vset.pattern.permute.xlu0 0
    %189 = vperm.xlu0 %188, %v119
    %v190 = vpop.permute.xlu0 %189
    %193 = vset.pattern.permute.xlu0 0
    %194 = vperm.xlu0 %193, %v120
    %v195 = vpop.permute.xlu0 %194
    %198 = vset.pattern.permute.xlu0 0
    %199 = vperm.xlu0 %198, %v121
    %v200 = vpop.permute.xlu0 %199
    %v202 = vld [vmem:[%s5] sm:$0xff]
    %v203 = vld [vmem:[%s5 + $0x8] sm:$0xff]
    %v204 = vld [vmem:[%s5 + $0x10] sm:$0xff]
    %v205 = vld [vmem:[%s5 + $0x18] sm:$0xff]
    %v206 = vld [vmem:[%s5 + $0x20] sm:$0xff]
    %v207 = vld [vmem:[%s5 + $0x28] sm:$0xff]
    %v208 = vld [vmem:[%s5 + $0x30] sm:$0xff]
    %v209 = vld [vmem:[%s5 + $0x38] sm:$0xff]
    %211 = vset.pattern.permute.xlu0 0
    %212 = vperm.xlu0 %211, %v202
    %v213 = vpop.permute.xlu0 %212
    %216 = vset.pattern.permute.xlu0 0
    %217 = vperm.xlu0 %216, %v203
    %v218 = vpop.permute.xlu0 %217
    %221 = vset.pattern.permute.xlu0 0
    %222 = vperm.xlu0 %221, %v204
    %v223 = vpop.permute.xlu0 %222
    %226 = vset.pattern.permute.xlu0 0
    %227 = vperm.xlu0 %226, %v205
    %v228 = vpop.permute.xlu0 %227
    %231 = vset.pattern.permute.xlu0 0
    %232 = vperm.xlu0 %231, %v206
    %v233 = vpop.permute.xlu0 %232
    %236 = vset.pattern.permute.xlu0 0
    %237 = vperm.xlu0 %236, %v207
    %v238 = vpop.permute.xlu0 %237
    %241 = vset.pattern.permute.xlu0 0
    %242 = vperm.xlu0 %241, %v208
    %v243 = vpop.permute.xlu0 %242
    %246 = vset.pattern.permute.xlu0 0
    %247 = vperm.xlu0 %246, %v209
    %v248 = vpop.permute.xlu0 %247
    %v250 = vld [vmem:[%s7] sm:$0xff]
    %v251 = vld [vmem:[%s7 + $0x8] sm:$0xff]
    %v252 = vld [vmem:[%s7 + $0x10] sm:$0xff]
    %v253 = vld [vmem:[%s7 + $0x18] sm:$0xff]
    %255 = vset.pattern.permute.xlu0 0
    %256 = vperm.xlu0 %255, %v250
    %v257 = vpop.permute.xlu0 %256
    %260 = vset.pattern.permute.xlu0 0
    %261 = vperm.xlu0 %260, %v251
    %v262 = vpop.permute.xlu0 %261
    %265 = vset.pattern.permute.xlu0 0
    %266 = vperm.xlu0 %265, %v252
    %v267 = vpop.permute.xlu0 %266
    %270 = vset.pattern.permute.xlu0 0
    %271 = vperm.xlu0 %270, %v253
    %v272 = vpop.permute.xlu0 %271
    %v274 = vld [vmem:[%s0] sm:$0xff]
    %v275 = vld [vmem:[%s0 + $0x8] sm:$0xff]
    %v276 = vld [vmem:[%s0 + $0x10] sm:$0xff]
    %v277 = vld [vmem:[%s0 + $0x18] sm:$0xff]
    %v278 = vld [vmem:[%s0 + $0x20] sm:$0x1]
    %vm279 = vcmask 269312
    %v281 = vsel %vm279, %v30, 0
    %v284 = vsel %vm279, %v31, 0
    %v287 = vsel %vm279, %v32, 0
    %v290 = vsel %vm279, %v33, 0
    %v293 = vsel %vm279, %v34, 0
    %v296 = vsel %vm279, %v35, 0
    %v299 = vsel %vm279, %v36, 0
    %v302 = vsel %vm279, %v37, 0
    %v305 = vsel %vm279, %v38, 0
    %v308 = vsel %vm279, %v39, 0
    %v311 = vsel %vm279, %v40, 0
    %v314 = vsel %vm279, %v41, 0
    %v317 = vsel %vm279, %v42, 0
    %v320 = vsel %vm279, %v43, 0
    %v323 = vsel %vm279, %v44, 0
    %v326 = vsel %vm279, %v45, 0
    %v329 = vsel %vm279, %v46, 0
    %v332 = vsel %vm279, %v47, 0
    %v335 = vsel %vm279, %v48, 0
    %v338 = vsel %vm279, %v49, 0
    %v341 = vsel %vm279, %v50, 0
    %v344 = vsel %vm279, %v51, 0
    %v347 = vsel %vm279, %v52, 0
    %v350 = vsel %vm279, %v53, 0
    %v353 = vsel %vm279, %v54, 0
    %v356 = vsel %vm279, %v55, 0
    %v359 = vsel %vm279, %v56, 0
    %v362 = vsel %vm279, %v57, 0
    %v365 = vsel %vm279, %v58, 0
    %v368 = vsel %vm279, %v59, 0
    %v371 = vsel %vm279, %v60, 0
    %v374 = vsel %vm279, %v61, 0
    %vm376 = vcmask 1040384
    %v378 = vsel %vm376, %v278, 0
    %380 = vmatprep.subr.mxu0 0.0
    %381 = vmatpush1.msra.mxu0 0.0
    %382 = vmatprep.subr.mxu0 0.0
    %383 = vmatpush1.msra.mxu0 0.0
    %384 = vmatprep.subr.mxu0 0.0
    %385 = vmatpush1.msra.mxu0 0.0
    %386 = vmatprep.subr.mxu0 0.0
    %387 = vmatpush1.msra.mxu0 0.0
    %388 = vmatprep.subr.mxu0 0.0
    %389 = vmatpush1.msra.mxu0 0.0
    %390 = vmatprep.subr.mxu0 0.0
    %391 = vmatpush1.msra.mxu0 0.0
    %392 = vmatprep.subr.mxu0 0.0
    %393 = vmatpush1.msra.mxu0 0.0
    %394 = vmatprep.subr.mxu0 0.0
    %395 = vmatpush1.msra.mxu0 0.0
    %396 = vmatprep.subr.mxu0 0.0
    %397 = vmatpush1.msra.mxu0 0.0
    %398 = vmatprep.subr.mxu0 0.0
    %399 = vmatpush1.msra.mxu0 0.0
    %400 = vmatprep.subr.mxu0 0.0
    %401 = vmatpush1.msra.mxu0 0.0
    %402 = vmatprep.subr.mxu0 0.0
    %403 = vmatpush1.msra.mxu0 %v378
    %404 = vmatprep.subr.mxu0 0.0
    %405 = vmatpush1.msra.mxu0 %v277
    %406 = vmatprep.subr.mxu0 0.0
    %407 = vmatpush1.msra.mxu0 %v276
    %408 = vmatprep.subr.mxu0 0.0
    %409 = vmatpush1.msra.mxu0 %v275
    %410 = vmatprep.subr.mxu0 0.0
    %411 = vmatpush1.msra.mxu0 %v274
    %412 = vmatprep.subr.mxu0 0.0
    %413 = vmatpush2.msra.mxu0 0.0
    %414 = vmatprep.subr.mxu0 0.0
    %415 = vmatpush2.msra.mxu0 0.0
    %416 = vmatprep.subr.mxu0 0.0
    %417 = vmatpush2.msra.mxu0 0.0
    %418 = vmatprep.subr.mxu0 0.0
    %419 = vmatpush2.msra.mxu0 0.0
    %420 = vmatprep.subr.mxu0 0.0
    %421 = vmatpush2.msra.mxu0 0.0
    %422 = vmatprep.subr.mxu0 0.0
    %423 = vmatpush2.msra.mxu0 0.0
    %424 = vmatprep.subr.mxu0 0.0
    %425 = vmatpush2.msra.mxu0 0.0
    %426 = vmatprep.subr.mxu0 0.0
    %427 = vmatpush2.msra.mxu0 0.0
    %428 = vmatprep.subr.mxu0 0.0
    %429 = vmatpush2.msra.mxu0 0.0
    %430 = vmatprep.subr.mxu0 0.0
    %431 = vmatpush2.msra.mxu0 0.0
    %432 = vmatprep.subr.mxu0 0.0
    %433 = vmatpush2.msra.mxu0 0.0
    %434 = vmatprep.subr.mxu0 0.0
    %435 = vmatpush2.msra.mxu0 0.0
    %436 = vmatprep.subr.mxu0 0.0
    %437 = vmatpush2.msra.mxu0 0.0
    %438 = vmatprep.subr.mxu0 0.0
    %439 = vmatpush2.msra.mxu0 0.0
    %440 = vmatprep.subr.mxu0 0.0
    %441 = vmatpush2.msra.mxu0 0.0
    %442 = vmatprep.subr.mxu0 0.0
    %443 = vmatpush2.msra.mxu0 0.0
    %444 = vmatprep.mubr.f32.mxu0 0.0
    %445 = vmatmul.mubr.f32.gmra.mxu0 %v281
    %v446 = vpop.f32.mrf.mxu0
    %v447 = vadd.f32 0.0, %v446
    %v448 = vpop.f32.mrf.mxu0
    %449 = vmatprep.mubr.f32.mxu0 0.0
    %450 = vmatmul.mubr.f32.gmra.mxu0 %v284
    %v451 = vpop.f32.mrf.mxu0
    %v452 = vadd.f32 0.0, %v451
    %v453 = vpop.f32.mrf.mxu0
    %454 = vmatprep.mubr.f32.mxu0 0.0
    %455 = vmatmul.mubr.f32.gmra.mxu0 %v287
    %v456 = vpop.f32.mrf.mxu0
    %v457 = vadd.f32 0.0, %v456
    %v458 = vpop.f32.mrf.mxu0
    %459 = vmatprep.mubr.f32.mxu0 0.0
    %460 = vmatmul.mubr.f32.gmra.mxu0 %v290
    %v461 = vpop.f32.mrf.mxu0
    %v462 = vadd.f32 0.0, %v461
    %v463 = vpop.f32.mrf.mxu0
    %464 = vmatprep.mubr.f32.mxu0 0.0
    %465 = vmatmul.mubr.f32.gmra.mxu0 %v293
    %v466 = vpop.f32.mrf.mxu0
    %v467 = vadd.f32 0.0, %v466
    %v468 = vpop.f32.mrf.mxu0
    %469 = vmatprep.mubr.f32.mxu0 0.0
    %470 = vmatmul.mubr.f32.gmra.mxu0 %v296
    %v471 = vpop.f32.mrf.mxu0
    %v472 = vadd.f32 0.0, %v471
    %v473 = vpop.f32.mrf.mxu0
    %474 = vmatprep.mubr.f32.mxu0 0.0
    %475 = vmatmul.mubr.f32.gmra.mxu0 %v299
    %v476 = vpop.f32.mrf.mxu0
    %v477 = vadd.f32 0.0, %v476
    %v478 = vpop.f32.mrf.mxu0
    %479 = vmatprep.mubr.f32.mxu0 0.0
    %480 = vmatmul.mubr.f32.gmra.mxu0 %v302
    %v481 = vpop.f32.mrf.mxu0
    %v482 = vadd.f32 0.0, %v481
    %v483 = vpop.f32.mrf.mxu0
    %484 = vmatprep.mubr.f32.mxu0 0.0
    %485 = vmatmul.mubr.f32.gmra.mxu0 %v305
    %v486 = vpop.f32.mrf.mxu0
    %v487 = vadd.f32 0.0, %v486
    %v488 = vpop.f32.mrf.mxu0
    %489 = vmatprep.mubr.f32.mxu0 0.0
    %490 = vmatmul.mubr.f32.gmra.mxu0 %v308
    %v491 = vpop.f32.mrf.mxu0
    %v492 = vadd.f32 0.0, %v491
    %v493 = vpop.f32.mrf.mxu0
    %494 = vmatprep.mubr.f32.mxu0 0.0
    %495 = vmatmul.mubr.f32.gmra.mxu0 %v311
    %v496 = vpop.f32.mrf.mxu0
    %v497 = vadd.f32 0.0, %v496
    %v498 = vpop.f32.mrf.mxu0
    %499 = vmatprep.mubr.f32.mxu0 0.0
    %500 = vmatmul.mubr.f32.gmra.mxu0 %v314
    %v501 = vpop.f32.mrf.mxu0
    %v502 = vadd.f32 0.0, %v501
    %v503 = vpop.f32.mrf.mxu0
    %504 = vmatprep.mubr.f32.mxu0 0.0
    %505 = vmatmul.mubr.f32.gmra.mxu0 %v317
    %v506 = vpop.f32.mrf.mxu0
    %v507 = vadd.f32 0.0, %v506
    %v508 = vpop.f32.mrf.mxu0
    %509 = vmatprep.mubr.f32.mxu0 0.0
    %510 = vmatmul.mubr.f32.gmra.mxu0 %v320
    %v511 = vpop.f32.mrf.mxu0
    %v512 = vadd.f32 0.0, %v511
    %v513 = vpop.f32.mrf.mxu0
    %514 = vmatprep.mubr.f32.mxu0 0.0
    %515 = vmatmul.mubr.f32.gmra.mxu0 %v323
    %v516 = vpop.f32.mrf.mxu0
    %v517 = vadd.f32 0.0, %v516
    %v518 = vpop.f32.mrf.mxu0
    %519 = vmatprep.mubr.f32.mxu0 0.0
    %520 = vmatmul.mubr.f32.gmra.mxu0 %v326
    %v521 = vpop.f32.mrf.mxu0
    %v522 = vadd.f32 0.0, %v521
    %v523 = vpop.f32.mrf.mxu0
    %524 = vmatprep.mubr.f32.mxu0 0.0
    %525 = vmatmul.mubr.f32.gmra.mxu0 %v329
    %v526 = vpop.f32.mrf.mxu0
    %v527 = vadd.f32 0.0, %v526
    %v528 = vpop.f32.mrf.mxu0
    %529 = vmatprep.mubr.f32.mxu0 0.0
    %530 = vmatmul.mubr.f32.gmra.mxu0 %v332
    %v531 = vpop.f32.mrf.mxu0
    %v532 = vadd.f32 0.0, %v531
    %v533 = vpop.f32.mrf.mxu0
    %534 = vmatprep.mubr.f32.mxu0 0.0
    %535 = vmatmul.mubr.f32.gmra.mxu0 %v335
    %v536 = vpop.f32.mrf.mxu0
    %v537 = vadd.f32 0.0, %v536
    %v538 = vpop.f32.mrf.mxu0
    %539 = vmatprep.mubr.f32.mxu0 0.0
    %540 = vmatmul.mubr.f32.gmra.mxu0 %v338
    %v541 = vpop.f32.mrf.mxu0
    %v542 = vadd.f32 0.0, %v541
    %v543 = vpop.f32.mrf.mxu0
    %544 = vmatprep.mubr.f32.mxu0 0.0
    %545 = vmatmul.mubr.f32.gmra.mxu0 %v341
    %v546 = vpop.f32.mrf.mxu0
    %v547 = vadd.f32 0.0, %v546
    %v548 = vpop.f32.mrf.mxu0
    %549 = vmatprep.mubr.f32.mxu0 0.0
    %550 = vmatmul.mubr.f32.gmra.mxu0 %v344
    %v551 = vpop.f32.mrf.mxu0
    %v552 = vadd.f32 0.0, %v551
    %v553 = vpop.f32.mrf.mxu0
    %554 = vmatprep.mubr.f32.mxu0 0.0
    %555 = vmatmul.mubr.f32.gmra.mxu0 %v347
    %v556 = vpop.f32.mrf.mxu0
    %v557 = vadd.f32 0.0, %v556
    %v558 = vpop.f32.mrf.mxu0
    %559 = vmatprep.mubr.f32.mxu0 0.0
    %560 = vmatmul.mubr.f32.gmra.mxu0 %v350
    %v561 = vpop.f32.mrf.mxu0
    %v562 = vadd.f32 0.0, %v561
    %v563 = vpop.f32.mrf.mxu0
    %564 = vmatprep.mubr.f32.mxu0 0.0
    %565 = vmatmul.mubr.f32.gmra.mxu0 %v353
    %v566 = vpop.f32.mrf.mxu0
    %v567 = vadd.f32 0.0, %v566
    %v568 = vpop.f32.mrf.mxu0
    %569 = vmatprep.mubr.f32.mxu0 0.0
    %570 = vmatmul.mubr.f32.gmra.mxu0 %v356
    %v571 = vpop.f32.mrf.mxu0
    %v572 = vadd.f32 0.0, %v571
    %v573 = vpop.f32.mrf.mxu0
    %574 = vmatprep.mubr.f32.mxu0 0.0
    %575 = vmatmul.mubr.f32.gmra.mxu0 %v359
    %v576 = vpop.f32.mrf.mxu0
    %v577 = vadd.f32 0.0, %v576
    %v578 = vpop.f32.mrf.mxu0
    %579 = vmatprep.mubr.f32.mxu0 0.0
    %580 = vmatmul.mubr.f32.gmra.mxu0 %v362
    %v581 = vpop.f32.mrf.mxu0
    %v582 = vadd.f32 0.0, %v581
    %v583 = vpop.f32.mrf.mxu0
    %584 = vmatprep.mubr.f32.mxu0 0.0
    %585 = vmatmul.mubr.f32.gmra.mxu0 %v365
    %v586 = vpop.f32.mrf.mxu0
    %v587 = vadd.f32 0.0, %v586
    %v588 = vpop.f32.mrf.mxu0
    %589 = vmatprep.mubr.f32.mxu0 0.0
    %590 = vmatmul.mubr.f32.gmra.mxu0 %v368
    %v591 = vpop.f32.mrf.mxu0
    %v592 = vadd.f32 0.0, %v591
    %v593 = vpop.f32.mrf.mxu0
    %594 = vmatprep.mubr.f32.mxu0 0.0
    %595 = vmatmul.mubr.f32.gmra.mxu0 %v371
    %v596 = vpop.f32.mrf.mxu0
    %v597 = vadd.f32 0.0, %v596
    %v598 = vpop.f32.mrf.mxu0
    %599 = vmatprep.mubr.f32.mxu0 0.0
    %600 = vmatmul.mubr.f32.gmra.mxu0 %v374
    %v601 = vpop.f32.mrf.mxu0
    %v602 = vadd.f32 0.0, %v601
    %v603 = vpop.f32.mrf.mxu0
    %604 = vdwg.mxu0
    %v605 = vxor.u32 %v447, 2147483648
    %v606 = vxor.u32 %v452, 2147483648
    %v607 = vxor.u32 %v457, 2147483648
    %v608 = vxor.u32 %v462, 2147483648
    %v609 = vxor.u32 %v467, 2147483648
    %v610 = vxor.u32 %v472, 2147483648
    %v611 = vxor.u32 %v477, 2147483648
    %v612 = vxor.u32 %v482, 2147483648
    %v613 = vxor.u32 %v487, 2147483648
    %v614 = vxor.u32 %v492, 2147483648
    %v615 = vxor.u32 %v497, 2147483648
    %v616 = vxor.u32 %v502, 2147483648
    %v617 = vxor.u32 %v507, 2147483648
    %v618 = vxor.u32 %v512, 2147483648
    %v619 = vxor.u32 %v517, 2147483648
    %v620 = vxor.u32 %v522, 2147483648
    %v621 = vxor.u32 %v527, 2147483648
    %v622 = vxor.u32 %v532, 2147483648
    %v623 = vxor.u32 %v537, 2147483648
    %v624 = vxor.u32 %v542, 2147483648
    %v625 = vxor.u32 %v547, 2147483648
    %v626 = vxor.u32 %v552, 2147483648
    %v627 = vxor.u32 %v557, 2147483648
    %v628 = vxor.u32 %v562, 2147483648
    %v629 = vxor.u32 %v567, 2147483648
    %v630 = vxor.u32 %v572, 2147483648
    %v631 = vxor.u32 %v577, 2147483648
    %v632 = vxor.u32 %v582, 2147483648
    %v633 = vxor.u32 %v587, 2147483648
    %v634 = vxor.u32 %v592, 2147483648
    %v635 = vxor.u32 %v597, 2147483648
    %v636 = vxor.u32 %v602, 2147483648
    %v637 = vmul.f32 %v605, 1.442695
    %v638 = vpow.pop %v637
    %v639 = vmul.f32 %v606, 1.442695
    %v640 = vpow.pop %v639
    %v641 = vmul.f32 %v607, 1.442695
    %v642 = vpow.pop %v641
    %v643 = vmul.f32 %v608, 1.442695
    %v644 = vpow.pop %v643
    %v645 = vmul.f32 %v609, 1.442695
    %v646 = vpow.pop %v645
    %v647 = vmul.f32 %v610, 1.442695
    %v648 = vpow.pop %v647
    %v649 = vmul.f32 %v611, 1.442695
    %v650 = vpow.pop %v649
    %v651 = vmul.f32 %v612, 1.442695
    %v652 = vpow.pop %v651
    %v653 = vmul.f32 %v613, 1.442695
    %v654 = vpow.pop %v653
    %v655 = vmul.f32 %v614, 1.442695
    %v656 = vpow.pop %v655
    %v657 = vmul.f32 %v615, 1.442695
    %v658 = vpow.pop %v657
    %v659 = vmul.f32 %v616, 1.442695
    %v660 = vpow.pop %v659
    %v661 = vmul.f32 %v617, 1.442695
    %v662 = vpow.pop %v661
    %v663 = vmul.f32 %v618, 1.442695
    %v664 = vpow.pop %v663
    %v665 = vmul.f32 %v619, 1.442695
    %v666 = vpow.pop %v665
    %v667 = vmul.f32 %v620, 1.442695
    %v668 = vpow.pop %v667
    %v669 = vmul.f32 %v621, 1.442695
    %v670 = vpow.pop %v669
    %v671 = vmul.f32 %v622, 1.442695
    %v672 = vpow.pop %v671
    %v673 = vmul.f32 %v623, 1.442695
    %v674 = vpow.pop %v673
    %v675 = vmul.f32 %v624, 1.442695
    %v676 = vpow.pop %v675
    %v677 = vmul.f32 %v625, 1.442695
    %v678 = vpow.pop %v677
    %v679 = vmul.f32 %v626, 1.442695
    %v680 = vpow.pop %v679
    %v681 = vmul.f32 %v627, 1.442695
    %v682 = vpow.pop %v681
    %v683 = vmul.f32 %v628, 1.442695
    %v684 = vpow.pop %v683
    %v685 = vmul.f32 %v629, 1.442695
    %v686 = vpow.pop %v685
    %v687 = vmul.f32 %v630, 1.442695
    %v688 = vpow.pop %v687
    %v689 = vmul.f32 %v631, 1.442695
    %v690 = vpow.pop %v689
    %v691 = vmul.f32 %v632, 1.442695
    %v692 = vpow.pop %v691
    %v693 = vmul.f32 %v633, 1.442695
    %v694 = vpow.pop %v693
    %v695 = vmul.f32 %v634, 1.442695
    %v696 = vpow.pop %v695
    %v697 = vmul.f32 %v635, 1.442695
    %v698 = vpow.pop %v697
    %v699 = vmul.f32 %v636, 1.442695
    %v700 = vpow.pop %v699
    %v701 = vadd.f32 %v638, 1.0
    %v702 = vadd.f32 %v640, 1.0
    %v703 = vadd.f32 %v642, 1.0
    %v704 = vadd.f32 %v644, 1.0
    %v705 = vadd.f32 %v646, 1.0
    %v706 = vadd.f32 %v648, 1.0
    %v707 = vadd.f32 %v650, 1.0
    %v708 = vadd.f32 %v652, 1.0
    %v709 = vadd.f32 %v654, 1.0
    %v710 = vadd.f32 %v656, 1.0
    %v711 = vadd.f32 %v658, 1.0
    %v712 = vadd.f32 %v660, 1.0
    %v713 = vadd.f32 %v662, 1.0
    %v714 = vadd.f32 %v664, 1.0
    %v715 = vadd.f32 %v666, 1.0
    %v716 = vadd.f32 %v668, 1.0
    %v717 = vadd.f32 %v670, 1.0
    %v718 = vadd.f32 %v672, 1.0
    %v719 = vadd.f32 %v674, 1.0
    %v720 = vadd.f32 %v676, 1.0
    %v721 = vadd.f32 %v678, 1.0
    %v722 = vadd.f32 %v680, 1.0
    %v723 = vadd.f32 %v682, 1.0
    %v724 = vadd.f32 %v684, 1.0
    %v725 = vadd.f32 %v686, 1.0
    %v726 = vadd.f32 %v688, 1.0
    %v727 = vadd.f32 %v690, 1.0
    %v728 = vadd.f32 %v692, 1.0
    %v729 = vadd.f32 %v694, 1.0
    %v730 = vadd.f32 %v696, 1.0
    %v731 = vadd.f32 %v698, 1.0
    %v732 = vadd.f32 %v700, 1.0
    %v733 = vrcp.pop %v701
    %v734 = vmul.f32 1.0, %v733
    %v735 = vrcp.pop %v702
    %v736 = vmul.f32 1.0, %v735
    %v737 = vrcp.pop %v703
    %v738 = vmul.f32 1.0, %v737
    %v739 = vrcp.pop %v704
    %v740 = vmul.f32 1.0, %v739
    %v741 = vrcp.pop %v705
    %v742 = vmul.f32 1.0, %v741
    %v743 = vrcp.pop %v706
    %v744 = vmul.f32 1.0, %v743
    %v745 = vrcp.pop %v707
    %v746 = vmul.f32 1.0, %v745
    %v747 = vrcp.pop %v708
    %v748 = vmul.f32 1.0, %v747
    %v749 = vrcp.pop %v709
    %v750 = vmul.f32 1.0, %v749
    %v751 = vrcp.pop %v710
    %v752 = vmul.f32 1.0, %v751
    %v753 = vrcp.pop %v711
    %v754 = vmul.f32 1.0, %v753
    %v755 = vrcp.pop %v712
    %v756 = vmul.f32 1.0, %v755
    %v757 = vrcp.pop %v713
    %v758 = vmul.f32 1.0, %v757
    %v759 = vrcp.pop %v714
    %v760 = vmul.f32 1.0, %v759
    %v761 = vrcp.pop %v715
    %v762 = vmul.f32 1.0, %v761
    %v763 = vrcp.pop %v716
    %v764 = vmul.f32 1.0, %v763
    %v765 = vrcp.pop %v717
    %v766 = vmul.f32 1.0, %v765
    %v767 = vrcp.pop %v718
    %v768 = vmul.f32 1.0, %v767
    %v769 = vrcp.pop %v719
    %v770 = vmul.f32 1.0, %v769
    %v771 = vrcp.pop %v720
    %v772 = vmul.f32 1.0, %v771
    %v773 = vrcp.pop %v721
    %v774 = vmul.f32 1.0, %v773
    %v775 = vrcp.pop %v722
    %v776 = vmul.f32 1.0, %v775
    %v777 = vrcp.pop %v723
    %v778 = vmul.f32 1.0, %v777
    %v779 = vrcp.pop %v724
    %v780 = vmul.f32 1.0, %v779
    %v781 = vrcp.pop %v725
    %v782 = vmul.f32 1.0, %v781
    %v783 = vrcp.pop %v726
    %v784 = vmul.f32 1.0, %v783
    %v785 = vrcp.pop %v727
    %v786 = vmul.f32 1.0, %v785
    %v787 = vrcp.pop %v728
    %v788 = vmul.f32 1.0, %v787
    %v789 = vrcp.pop %v729
    %v790 = vmul.f32 1.0, %v789
    %v791 = vrcp.pop %v730
    %v792 = vmul.f32 1.0, %v791
    %v793 = vrcp.pop %v731
    %v794 = vmul.f32 1.0, %v793
    %v795 = vrcp.pop %v732
    %v796 = vmul.f32 1.0, %v795
    %v797 = vmul.f32 %v447, %v734
    %v798 = vmul.f32 %v452, %v736
    %v799 = vmul.f32 %v457, %v738
    %v800 = vmul.f32 %v462, %v740
    %v801 = vmul.f32 %v467, %v742
    %v802 = vmul.f32 %v472, %v744
    %v803 = vmul.f32 %v477, %v746
    %v804 = vmul.f32 %v482, %v748
    %v805 = vmul.f32 %v487, %v750
    %v806 = vmul.f32 %v492, %v752
    %v807 = vmul.f32 %v497, %v754
    %v808 = vmul.f32 %v502, %v756
    %v809 = vmul.f32 %v507, %v758
    %v810 = vmul.f32 %v512, %v760
    %v811 = vmul.f32 %v517, %v762
    %v812 = vmul.f32 %v522, %v764
    %v813 = vmul.f32 %v527, %v766
    %v814 = vmul.f32 %v532, %v768
    %v815 = vmul.f32 %v537, %v770
    %v816 = vmul.f32 %v542, %v772
    %v817 = vmul.f32 %v547, %v774
    %v818 = vmul.f32 %v552, %v776
    %v819 = vmul.f32 %v557, %v778
    %v820 = vmul.f32 %v562, %v780
    %v821 = vmul.f32 %v567, %v782
    %v822 = vmul.f32 %v572, %v784
    %v823 = vmul.f32 %v577, %v786
    %v824 = vmul.f32 %v582, %v788
    %v825 = vmul.f32 %v587, %v790
    %v826 = vmul.f32 %v592, %v792
    %v827 = vmul.f32 %v597, %v794
    %v828 = vmul.f32 %v602, %v796
    %829 = vmatprep.subr.mxu0 0.0
    %830 = vmatpush1.msra.mxu0 %v812
    %831 = vmatprep.subr.mxu0 0.0
    %832 = vmatpush1.msra.mxu0 %v811
    %833 = vmatprep.subr.mxu0 0.0
    %834 = vmatpush1.msra.mxu0 %v810
    %835 = vmatprep.subr.mxu0 0.0
    %836 = vmatpush1.msra.mxu0 %v809
    %837 = vmatprep.subr.mxu0 0.0
    %838 = vmatpush1.msra.mxu0 %v808
    %839 = vmatprep.subr.mxu0 0.0
    %840 = vmatpush1.msra.mxu0 %v807
    %841 = vmatprep.subr.mxu0 0.0
    %842 = vmatpush1.msra.mxu0 %v806
    %843 = vmatprep.subr.mxu0 0.0
    %844 = vmatpush1.msra.mxu0 %v805
    %845 = vmatprep.subr.mxu0 0.0
    %846 = vmatpush1.msra.mxu0 %v804
    %847 = vmatprep.subr.mxu0 0.0
    %848 = vmatpush1.msra.mxu0 %v803
    %849 = vmatprep.subr.mxu0 0.0
    %850 = vmatpush1.msra.mxu0 %v802
    %851 = vmatprep.subr.mxu0 0.0
    %852 = vmatpush1.msra.mxu0 %v801
    %853 = vmatprep.subr.mxu0 0.0
    %854 = vmatpush1.msra.mxu0 %v800
    %855 = vmatprep.subr.mxu0 0.0
    %856 = vmatpush1.msra.mxu0 %v799
    %857 = vmatprep.subr.mxu0 0.0
    %858 = vmatpush1.msra.mxu0 %v798
    %859 = vmatprep.subr.mxu0 0.0
    %860 = vmatpush1.msra.mxu0 %v797
    %861 = vmatprep.subr.mxu0 0.0
    %862 = vmatpush2.msra.mxu0 %v828
    %863 = vmatprep.subr.mxu0 0.0
    %864 = vmatpush2.msra.mxu0 %v827
    %865 = vmatprep.subr.mxu0 0.0
    %866 = vmatpush2.msra.mxu0 %v826
    %867 = vmatprep.subr.mxu0 0.0
    %868 = vmatpush2.msra.mxu0 %v825
    %869 = vmatprep.subr.mxu0 0.0
    %870 = vmatpush2.msra.mxu0 %v824
    %871 = vmatprep.subr.mxu0 0.0
    %872 = vmatpush2.msra.mxu0 %v823
    %873 = vmatprep.subr.mxu0 0.0
    %874 = vmatpush2.msra.mxu0 %v822
    %875 = vmatprep.subr.mxu0 0.0
    %876 = vmatpush2.msra.mxu0 %v821
    %877 = vmatprep.subr.mxu0 0.0
    %878 = vmatpush2.msra.mxu0 %v820
    %879 = vmatprep.subr.mxu0 0.0
    %880 = vmatpush2.msra.mxu0 %v819
    %881 = vmatprep.subr.mxu0 0.0
    %882 = vmatpush2.msra.mxu0 %v818
    %883 = vmatprep.subr.mxu0 0.0
    %884 = vmatpush2.msra.mxu0 %v817
    %885 = vmatprep.subr.mxu0 0.0
    %886 = vmatpush2.msra.mxu0 %v816
    %887 = vmatprep.subr.mxu0 0.0
    %888 = vmatpush2.msra.mxu0 %v815
    %889 = vmatprep.subr.mxu0 0.0
    %890 = vmatpush2.msra.mxu0 %v814
    %891 = vmatprep.subr.mxu0 0.0
    %892 = vmatpush2.msra.mxu0 %v813
    %893 = vmatprep.mubr.f32.mxu0 %v63
    %894 = vmatmul.mubr.f32.gmra.mxu0 %v62
    %v895 = vpop.f32.mrf.mxu0
    %v896 = vadd.f32 %v125, %v895
    %v897 = vpop.f32.mrf.mxu0
    %898 = vmatprep.mubr.f32.mxu0 %v65
    %899 = vmatmul.mubr.f32.gmra.mxu0 %v64
    %v900 = vpop.f32.mrf.mxu0
    %v901 = vadd.f32 %v130, %v900
    %v902 = vpop.f32.mrf.mxu0
    %903 = vmatprep.mubr.f32.mxu0 %v67
    %904 = vmatmul.mubr.f32.gmra.mxu0 %v66
    %v905 = vpop.f32.mrf.mxu0
    %v906 = vadd.f32 %v135, %v905
    %v907 = vpop.f32.mrf.mxu0
    %908 = vmatprep.mubr.f32.mxu0 %v69
    %909 = vmatmul.mubr.f32.gmra.mxu0 %v68
    %v910 = vpop.f32.mrf.mxu0
    %v911 = vadd.f32 %v140, %v910
    %v912 = vpop.f32.mrf.mxu0
    %913 = vmatprep.mubr.f32.mxu0 %v71
    %914 = vmatmul.mubr.f32.gmra.mxu0 %v70
    %v915 = vpop.f32.mrf.mxu0
    %v916 = vadd.f32 %v145, %v915
    %v917 = vpop.f32.mrf.mxu0
    %918 = vmatprep.mubr.f32.mxu0 %v73
    %919 = vmatmul.mubr.f32.gmra.mxu0 %v72
    %v920 = vpop.f32.mrf.mxu0
    %v921 = vadd.f32 %v150, %v920
    %v922 = vpop.f32.mrf.mxu0
    %923 = vmatprep.mubr.f32.mxu0 %v75
    %924 = vmatmul.mubr.f32.gmra.mxu0 %v74
    %v925 = vpop.f32.mrf.mxu0
    %v926 = vadd.f32 %v155, %v925
    %v927 = vpop.f32.mrf.mxu0
    %928 = vmatprep.mubr.f32.mxu0 %v77
    %929 = vmatmul.mubr.f32.gmra.mxu0 %v76
    %v930 = vpop.f32.mrf.mxu0
    %v931 = vadd.f32 %v160, %v930
    %v932 = vpop.f32.mrf.mxu0
    %933 = vmatprep.mubr.f32.mxu0 %v79
    %934 = vmatmul.mubr.f32.gmra.mxu0 %v78
    %v935 = vpop.f32.mrf.mxu0
    %v936 = vadd.f32 %v165, %v935
    %v937 = vpop.f32.mrf.mxu0
    %938 = vmatprep.mubr.f32.mxu0 %v81
    %939 = vmatmul.mubr.f32.gmra.mxu0 %v80
    %v940 = vpop.f32.mrf.mxu0
    %v941 = vadd.f32 %v170, %v940
    %v942 = vpop.f32.mrf.mxu0
    %943 = vmatprep.mubr.f32.mxu0 %v83
    %944 = vmatmul.mubr.f32.gmra.mxu0 %v82
    %v945 = vpop.f32.mrf.mxu0
    %v946 = vadd.f32 %v175, %v945
    %v947 = vpop.f32.mrf.mxu0
    %948 = vmatprep.mubr.f32.mxu0 %v85
    %949 = vmatmul.mubr.f32.gmra.mxu0 %v84
    %v950 = vpop.f32.mrf.mxu0
    %v951 = vadd.f32 %v180, %v950
    %v952 = vpop.f32.mrf.mxu0
    %953 = vmatprep.mubr.f32.mxu0 %v87
    %954 = vmatmul.mubr.f32.gmra.mxu0 %v86
    %v955 = vpop.f32.mrf.mxu0
    %v956 = vadd.f32 %v185, %v955
    %v957 = vpop.f32.mrf.mxu0
    %958 = vmatprep.mubr.f32.mxu0 %v89
    %959 = vmatmul.mubr.f32.gmra.mxu0 %v88
    %v960 = vpop.f32.mrf.mxu0
    %v961 = vadd.f32 %v190, %v960
    %v962 = vpop.f32.mrf.mxu0
    %963 = vmatprep.mubr.f32.mxu0 %v91
    %964 = vmatmul.mubr.f32.gmra.mxu0 %v90
    %v965 = vpop.f32.mrf.mxu0
    %v966 = vadd.f32 %v195, %v965
    %v967 = vpop.f32.mrf.mxu0
    %968 = vmatprep.mubr.f32.mxu0 %v93
    %969 = vmatmul.mubr.f32.gmra.mxu0 %v92
    %v970 = vpop.f32.mrf.mxu0
    %v971 = vadd.f32 %v200, %v970
    %v972 = vpop.f32.mrf.mxu0
    %973 = vdwg.mxu0
    %v974 = vxor.u32 %v896, 2147483648
    %v975 = vxor.u32 %v901, 2147483648
    %v976 = vxor.u32 %v906, 2147483648
    %v977 = vxor.u32 %v911, 2147483648
    %v978 = vxor.u32 %v916, 2147483648
    %v979 = vxor.u32 %v921, 2147483648
    %v980 = vxor.u32 %v926, 2147483648
    %v981 = vxor.u32 %v931, 2147483648
    %v982 = vxor.u32 %v936, 2147483648
    %v983 = vxor.u32 %v941, 2147483648
    %v984 = vxor.u32 %v946, 2147483648
    %v985 = vxor.u32 %v951, 2147483648
    %v986 = vxor.u32 %v956, 2147483648
    %v987 = vxor.u32 %v961, 2147483648
    %v988 = vxor.u32 %v966, 2147483648
    %v989 = vxor.u32 %v971, 2147483648
    %v990 = vmul.f32 %v974, 1.442695
    %v991 = vpow.pop %v990
    %v992 = vmul.f32 %v975, 1.442695
    %v993 = vpow.pop %v992
    %v994 = vmul.f32 %v976, 1.442695
    %v995 = vpow.pop %v994
    %v996 = vmul.f32 %v977, 1.442695
    %v997 = vpow.pop %v996
    %v998 = vmul.f32 %v978, 1.442695
    %v999 = vpow.pop %v998
    %v1000 = vmul.f32 %v979, 1.442695
    %v1001 = vpow.pop %v1000
    %v1002 = vmul.f32 %v980, 1.442695
    %v1003 = vpow.pop %v1002
    %v1004 = vmul.f32 %v981, 1.442695
    %v1005 = vpow.pop %v1004
    %v1006 = vmul.f32 %v982, 1.442695
    %v1007 = vpow.pop %v1006
    %v1008 = vmul.f32 %v983, 1.442695
    %v1009 = vpow.pop %v1008
    %v1010 = vmul.f32 %v984, 1.442695
    %v1011 = vpow.pop %v1010
    %v1012 = vmul.f32 %v985, 1.442695
    %v1013 = vpow.pop %v1012
    %v1014 = vmul.f32 %v986, 1.442695
    %v1015 = vpow.pop %v1014
    %v1016 = vmul.f32 %v987, 1.442695
    %v1017 = vpow.pop %v1016
    %v1018 = vmul.f32 %v988, 1.442695
    %v1019 = vpow.pop %v1018
    %v1020 = vmul.f32 %v989, 1.442695
    %v1021 = vpow.pop %v1020
    %v1022 = vadd.f32 %v991, 1.0
    %v1023 = vadd.f32 %v993, 1.0
    %v1024 = vadd.f32 %v995, 1.0
    %v1025 = vadd.f32 %v997, 1.0
    %v1026 = vadd.f32 %v999, 1.0
    %v1027 = vadd.f32 %v1001, 1.0
    %v1028 = vadd.f32 %v1003, 1.0
    %v1029 = vadd.f32 %v1005, 1.0
    %v1030 = vadd.f32 %v1007, 1.0
    %v1031 = vadd.f32 %v1009, 1.0
    %v1032 = vadd.f32 %v1011, 1.0
    %v1033 = vadd.f32 %v1013, 1.0
    %v1034 = vadd.f32 %v1015, 1.0
    %v1035 = vadd.f32 %v1017, 1.0
    %v1036 = vadd.f32 %v1019, 1.0
    %v1037 = vadd.f32 %v1021, 1.0
    %v1038 = vrcp.pop %v1022
    %v1039 = vmul.f32 1.0, %v1038
    %v1040 = vrcp.pop %v1023
    %v1041 = vmul.f32 1.0, %v1040
    %v1042 = vrcp.pop %v1024
    %v1043 = vmul.f32 1.0, %v1042
    %v1044 = vrcp.pop %v1025
    %v1045 = vmul.f32 1.0, %v1044
    %v1046 = vrcp.pop %v1026
    %v1047 = vmul.f32 1.0, %v1046
    %v1048 = vrcp.pop %v1027
    %v1049 = vmul.f32 1.0, %v1048
    %v1050 = vrcp.pop %v1028
    %v1051 = vmul.f32 1.0, %v1050
    %v1052 = vrcp.pop %v1029
    %v1053 = vmul.f32 1.0, %v1052
    %v1054 = vrcp.pop %v1030
    %v1055 = vmul.f32 1.0, %v1054
    %v1056 = vrcp.pop %v1031
    %v1057 = vmul.f32 1.0, %v1056
    %v1058 = vrcp.pop %v1032
    %v1059 = vmul.f32 1.0, %v1058
    %v1060 = vrcp.pop %v1033
    %v1061 = vmul.f32 1.0, %v1060
    %v1062 = vrcp.pop %v1034
    %v1063 = vmul.f32 1.0, %v1062
    %v1064 = vrcp.pop %v1035
    %v1065 = vmul.f32 1.0, %v1064
    %v1066 = vrcp.pop %v1036
    %v1067 = vmul.f32 1.0, %v1066
    %v1068 = vrcp.pop %v1037
    %v1069 = vmul.f32 1.0, %v1068
    %v1070 = vmul.f32 %v896, %v1039
    %v1071 = vmul.f32 %v901, %v1041
    %v1072 = vmul.f32 %v906, %v1043
    %v1073 = vmul.f32 %v911, %v1045
    %v1074 = vmul.f32 %v916, %v1047
    %v1075 = vmul.f32 %v921, %v1049
    %v1076 = vmul.f32 %v926, %v1051
    %v1077 = vmul.f32 %v931, %v1053
    %v1078 = vmul.f32 %v936, %v1055
    %v1079 = vmul.f32 %v941, %v1057
    %v1080 = vmul.f32 %v946, %v1059
    %v1081 = vmul.f32 %v951, %v1061
    %v1082 = vmul.f32 %v956, %v1063
    %v1083 = vmul.f32 %v961, %v1065
    %v1084 = vmul.f32 %v966, %v1067
    %v1085 = vmul.f32 %v971, %v1069
    %1086 = vmatprep.subr.mxu0 0.0
    %1087 = vmatpush1.msra.mxu0 %v1085
    %1088 = vmatprep.subr.mxu0 0.0
    %1089 = vmatpush1.msra.mxu0 %v1084
    %1090 = vmatprep.subr.mxu0 0.0
    %1091 = vmatpush1.msra.mxu0 %v1083
    %1092 = vmatprep.subr.mxu0 0.0
    %1093 = vmatpush1.msra.mxu0 %v1082
    %1094 = vmatprep.subr.mxu0 0.0
    %1095 = vmatpush1.msra.mxu0 %v1081
    %1096 = vmatprep.subr.mxu0 0.0
    %1097 = vmatpush1.msra.mxu0 %v1080
    %1098 = vmatprep.subr.mxu0 0.0
    %1099 = vmatpush1.msra.mxu0 %v1079
    %1100 = vmatprep.subr.mxu0 0.0
    %1101 = vmatpush1.msra.mxu0 %v1078
    %1102 = vmatprep.subr.mxu0 0.0
    %1103 = vmatpush1.msra.mxu0 %v1077
    %1104 = vmatprep.subr.mxu0 0.0
    %1105 = vmatpush1.msra.mxu0 %v1076
    %1106 = vmatprep.subr.mxu0 0.0
    %1107 = vmatpush1.msra.mxu0 %v1075
    %1108 = vmatprep.subr.mxu0 0.0
    %1109 = vmatpush1.msra.mxu0 %v1074
    %1110 = vmatprep.subr.mxu0 0.0
    %1111 = vmatpush1.msra.mxu0 %v1073
    %1112 = vmatprep.subr.mxu0 0.0
    %1113 = vmatpush1.msra.mxu0 %v1072
    %1114 = vmatprep.subr.mxu0 0.0
    %1115 = vmatpush1.msra.mxu0 %v1071
    %1116 = vmatprep.subr.mxu0 0.0
    %1117 = vmatpush1.msra.mxu0 %v1070
    %1118 = vmatprep.subr.mxu0 0.0
    %1119 = vmatpush2.msra.mxu0 0.0
    %1120 = vmatprep.subr.mxu0 0.0
    %1121 = vmatpush2.msra.mxu0 0.0
    %1122 = vmatprep.subr.mxu0 0.0
    %1123 = vmatpush2.msra.mxu0 0.0
    %1124 = vmatprep.subr.mxu0 0.0
    %1125 = vmatpush2.msra.mxu0 0.0
    %1126 = vmatprep.subr.mxu0 0.0
    %1127 = vmatpush2.msra.mxu0 0.0
    %1128 = vmatprep.subr.mxu0 0.0
    %1129 = vmatpush2.msra.mxu0 0.0
    %1130 = vmatprep.subr.mxu0 0.0
    %1131 = vmatpush2.msra.mxu0 0.0
    %1132 = vmatprep.subr.mxu0 0.0
    %1133 = vmatpush2.msra.mxu0 0.0
    %1134 = vmatprep.subr.mxu0 0.0
    %1135 = vmatpush2.msra.mxu0 0.0
    %1136 = vmatprep.subr.mxu0 0.0
    %1137 = vmatpush2.msra.mxu0 0.0
    %1138 = vmatprep.subr.mxu0 0.0
    %1139 = vmatpush2.msra.mxu0 0.0
    %1140 = vmatprep.subr.mxu0 0.0
    %1141 = vmatpush2.msra.mxu0 0.0
    %1142 = vmatprep.subr.mxu0 0.0
    %1143 = vmatpush2.msra.mxu0 0.0
    %1144 = vmatprep.subr.mxu0 0.0
    %1145 = vmatpush2.msra.mxu0 0.0
    %1146 = vmatprep.subr.mxu0 0.0
    %1147 = vmatpush2.msra.mxu0 0.0
    %1148 = vmatprep.subr.mxu0 0.0
    %1149 = vmatpush2.msra.mxu0 0.0
    %1150 = vmatprep.mubr.f32.mxu0 0.0
    %1151 = vmatmul.mubr.f32.gmra.mxu0 %v94
    %v1152 = vpop.f32.mrf.mxu0
    %v1153 = vadd.f32 %v213, %v1152
    %v1154 = vpop.f32.mrf.mxu0
    %1155 = vmatprep.mubr.f32.mxu0 0.0
    %1156 = vmatmul.mubr.f32.gmra.mxu0 %v95
    %v1157 = vpop.f32.mrf.mxu0
    %v1158 = vadd.f32 %v218, %v1157
    %v1159 = vpop.f32.mrf.mxu0
    %1160 = vmatprep.mubr.f32.mxu0 0.0
    %1161 = vmatmul.mubr.f32.gmra.mxu0 %v96
    %v1162 = vpop.f32.mrf.mxu0
    %v1163 = vadd.f32 %v223, %v1162
    %v1164 = vpop.f32.mrf.mxu0
    %1165 = vmatprep.mubr.f32.mxu0 0.0
    %1166 = vmatmul.mubr.f32.gmra.mxu0 %v97
    %v1167 = vpop.f32.mrf.mxu0
    %v1168 = vadd.f32 %v228, %v1167
    %v1169 = vpop.f32.mrf.mxu0
    %1170 = vmatprep.mubr.f32.mxu0 0.0
    %1171 = vmatmul.mubr.f32.gmra.mxu0 %v98
    %v1172 = vpop.f32.mrf.mxu0
    %v1173 = vadd.f32 %v233, %v1172
    %v1174 = vpop.f32.mrf.mxu0
    %1175 = vmatprep.mubr.f32.mxu0 0.0
    %1176 = vmatmul.mubr.f32.gmra.mxu0 %v99
    %v1177 = vpop.f32.mrf.mxu0
    %v1178 = vadd.f32 %v238, %v1177
    %v1179 = vpop.f32.mrf.mxu0
    %1180 = vmatprep.mubr.f32.mxu0 0.0
    %1181 = vmatmul.mubr.f32.gmra.mxu0 %v100
    %v1182 = vpop.f32.mrf.mxu0
    %v1183 = vadd.f32 %v243, %v1182
    %v1184 = vpop.f32.mrf.mxu0
    %1185 = vmatprep.mubr.f32.mxu0 0.0
    %1186 = vmatmul.mubr.f32.gmra.mxu0 %v101
    %v1187 = vpop.f32.mrf.mxu0
    %v1188 = vadd.f32 %v248, %v1187
    %v1189 = vpop.f32.mrf.mxu0
    %1190 = vdwg.mxu0
    %v1191 = vxor.u32 %v1153, 2147483648
    %v1192 = vxor.u32 %v1158, 2147483648
    %v1193 = vxor.u32 %v1163, 2147483648
    %v1194 = vxor.u32 %v1168, 2147483648
    %v1195 = vxor.u32 %v1173, 2147483648
    %v1196 = vxor.u32 %v1178, 2147483648
    %v1197 = vxor.u32 %v1183, 2147483648
    %v1198 = vxor.u32 %v1188, 2147483648
    %v1199 = vmul.f32 %v1191, 1.442695
    %v1200 = vpow.pop %v1199
    %v1201 = vmul.f32 %v1192, 1.442695
    %v1202 = vpow.pop %v1201
    %v1203 = vmul.f32 %v1193, 1.442695
    %v1204 = vpow.pop %v1203
    %v1205 = vmul.f32 %v1194, 1.442695
    %v1206 = vpow.pop %v1205
    %v1207 = vmul.f32 %v1195, 1.442695
    %v1208 = vpow.pop %v1207
    %v1209 = vmul.f32 %v1196, 1.442695
    %v1210 = vpow.pop %v1209
    %v1211 = vmul.f32 %v1197, 1.442695
    %v1212 = vpow.pop %v1211
    %v1213 = vmul.f32 %v1198, 1.442695
    %v1214 = vpow.pop %v1213
    %v1215 = vadd.f32 %v1200, 1.0
    %v1216 = vadd.f32 %v1202, 1.0
    %v1217 = vadd.f32 %v1204, 1.0
    %v1218 = vadd.f32 %v1206, 1.0
    %v1219 = vadd.f32 %v1208, 1.0
    %v1220 = vadd.f32 %v1210, 1.0
    %v1221 = vadd.f32 %v1212, 1.0
    %v1222 = vadd.f32 %v1214, 1.0
    %v1223 = vrcp.pop %v1215
    %v1224 = vmul.f32 1.0, %v1223
    %v1225 = vrcp.pop %v1216
    %v1226 = vmul.f32 1.0, %v1225
    %v1227 = vrcp.pop %v1217
    %v1228 = vmul.f32 1.0, %v1227
    %v1229 = vrcp.pop %v1218
    %v1230 = vmul.f32 1.0, %v1229
    %v1231 = vrcp.pop %v1219
    %v1232 = vmul.f32 1.0, %v1231
    %v1233 = vrcp.pop %v1220
    %v1234 = vmul.f32 1.0, %v1233
    %v1235 = vrcp.pop %v1221
    %v1236 = vmul.f32 1.0, %v1235
    %v1237 = vrcp.pop %v1222
    %v1238 = vmul.f32 1.0, %v1237
    %v1239 = vmul.f32 %v1153, %v1224
    %v1240 = vmul.f32 %v1158, %v1226
    %v1241 = vmul.f32 %v1163, %v1228
    %v1242 = vmul.f32 %v1168, %v1230
    %v1243 = vmul.f32 %v1173, %v1232
    %v1244 = vmul.f32 %v1178, %v1234
    %v1245 = vmul.f32 %v1183, %v1236
    %v1246 = vmul.f32 %v1188, %v1238
    %vm1247 = vcmask 523264
    %v1249 = vsel %vm1247, %v102, 0
    %v1252 = vsel %vm1247, %v103, 0
    %v1255 = vsel %vm1247, %v104, 0
    %v1258 = vsel %vm1247, %v105, 0
    %1260 = vmatprep.subr.mxu0 0.0
    %1261 = vmatpush1.msra.mxu0 0.0
    %1262 = vmatprep.subr.mxu0 0.0
    %1263 = vmatpush1.msra.mxu0 0.0
    %1264 = vmatprep.subr.mxu0 0.0
    %1265 = vmatpush1.msra.mxu0 0.0
    %1266 = vmatprep.subr.mxu0 0.0
    %1267 = vmatpush1.msra.mxu0 0.0
    %1268 = vmatprep.subr.mxu0 0.0
    %1269 = vmatpush1.msra.mxu0 0.0
    %1270 = vmatprep.subr.mxu0 0.0
    %1271 = vmatpush1.msra.mxu0 0.0
    %1272 = vmatprep.subr.mxu0 0.0
    %1273 = vmatpush1.msra.mxu0 0.0
    %1274 = vmatprep.subr.mxu0 0.0
    %1275 = vmatpush1.msra.mxu0 0.0
    %1276 = vmatprep.subr.mxu0 0.0
    %1277 = vmatpush1.msra.mxu0 %v1246
    %1278 = vmatprep.subr.mxu0 0.0
    %1279 = vmatpush1.msra.mxu0 %v1245
    %1280 = vmatprep.subr.mxu0 0.0
    %1281 = vmatpush1.msra.mxu0 %v1244
    %1282 = vmatprep.subr.mxu0 0.0
    %1283 = vmatpush1.msra.mxu0 %v1243
    %1284 = vmatprep.subr.mxu0 0.0
    %1285 = vmatpush1.msra.mxu0 %v1242
    %1286 = vmatprep.subr.mxu0 0.0
    %1287 = vmatpush1.msra.mxu0 %v1241
    %1288 = vmatprep.subr.mxu0 0.0
    %1289 = vmatpush1.msra.mxu0 %v1240
    %1290 = vmatprep.subr.mxu0 0.0
    %1291 = vmatpush1.msra.mxu0 %v1239
    %1292 = vmatprep.subr.mxu0 0.0
    %1293 = vmatpush2.msra.mxu0 0.0
    %1294 = vmatprep.subr.mxu0 0.0
    %1295 = vmatpush2.msra.mxu0 0.0
    %1296 = vmatprep.subr.mxu0 0.0
    %1297 = vmatpush2.msra.mxu0 0.0
    %1298 = vmatprep.subr.mxu0 0.0
    %1299 = vmatpush2.msra.mxu0 0.0
    %1300 = vmatprep.subr.mxu0 0.0
    %1301 = vmatpush2.msra.mxu0 0.0
    %1302 = vmatprep.subr.mxu0 0.0
    %1303 = vmatpush2.msra.mxu0 0.0
    %1304 = vmatprep.subr.mxu0 0.0
    %1305 = vmatpush2.msra.mxu0 0.0
    %1306 = vmatprep.subr.mxu0 0.0
    %1307 = vmatpush2.msra.mxu0 0.0
    %1308 = vmatprep.subr.mxu0 0.0
    %1309 = vmatpush2.msra.mxu0 0.0
    %1310 = vmatprep.subr.mxu0 0.0
    %1311 = vmatpush2.msra.mxu0 0.0
    %1312 = vmatprep.subr.mxu0 0.0
    %1313 = vmatpush2.msra.mxu0 0.0
    %1314 = vmatprep.subr.mxu0 0.0
    %1315 = vmatpush2.msra.mxu0 0.0
    %1316 = vmatprep.subr.mxu0 0.0
    %1317 = vmatpush2.msra.mxu0 0.0
    %1318 = vmatprep.subr.mxu0 0.0
    %1319 = vmatpush2.msra.mxu0 0.0
    %1320 = vmatprep.subr.mxu0 0.0
    %1321 = vmatpush2.msra.mxu0 0.0
    %1322 = vmatprep.subr.mxu0 0.0
    %1323 = vmatpush2.msra.mxu0 0.0
    %1324 = vmatprep.mubr.f32.mxu0 0.0
    %1325 = vmatmul.mubr.f32.gmra.mxu0 %v1249
    %v1326 = vpop.f32.mrf.mxu0
    %v1327 = vadd.f32 %v257, %v1326
    %v1328 = vpop.f32.mrf.mxu0
    %1329 = vmatprep.mubr.f32.mxu0 0.0
    %1330 = vmatmul.mubr.f32.gmra.mxu0 %v1252
    %v1331 = vpop.f32.mrf.mxu0
    %v1332 = vadd.f32 %v262, %v1331
    %v1333 = vpop.f32.mrf.mxu0
    %1334 = vmatprep.mubr.f32.mxu0 0.0
    %1335 = vmatmul.mubr.f32.gmra.mxu0 %v1255
    %v1336 = vpop.f32.mrf.mxu0
    %v1337 = vadd.f32 %v267, %v1336
    %v1338 = vpop.f32.mrf.mxu0
    %1339 = vmatprep.mubr.f32.mxu0 0.0
    %1340 = vmatmul.mubr.f32.gmra.mxu0 %v1258
    %v1341 = vpop.f32.mrf.mxu0
    %v1342 = vadd.f32 %v272, %v1341
    %v1343 = vpop.f32.mrf.mxu0
    %1344 = vdwg.mxu0
    %1345 = vst [vmem:[#allocation2] sm:$0xff] %v1327
    %1346 = vst [vmem:[#allocation2 + $0x8] sm:$0xff] %v1332
    %1347 = vst [vmem:[#allocation2 + $0x10] sm:$0xff] %v1337
    %1348 = vst [vmem:[#allocation2 + $0x18] sm:$0xff] %v1342
    // Predicated region
    $region34: #{tpu_custom_call.1} parent=1 // pred_check
      _
    $region35: #{tpu_custom_call.1} parent=1 // pred_check_branch
      %1350 = sbr.rel (0) target = $region37
    $region36: #{tpu_custom_call.1} parent=1 // pred_region
      %s1352 = ssub.s32 512, 512
      %1353 = vsyncadd [#allocation3], %s1352
      %s1354 = sshll.u32 [#allocation2], 4
      %s1355 = int_to_ptr.vmem [resolvable:$true] %s1354
      %1360 = dma.vmem_to_hbm [thread:$0]  %s1355, 512, %s8, [#allocation3], 128, 128, 8
    $region37: #{tpu_custom_call.1} parent=1 // pred_fallthru
      _
    // Predicated region
    $region38: #{tpu_custom_call.1} parent=1 // pred_check
      _
    $region39: #{tpu_custom_call.1} parent=1 // pred_check_branch
      %1362 = sbr.rel (0) target = $region41
    $region40: #{tpu_custom_call.1} parent=1 // pred_region
      %1363 = dma.done [#allocation3], 512
    $region41: #{tpu_custom_call.1} parent=1 // pred_fallthru
      _
    %1364 = vsyncpa [#allocation3], 1

</llo_original>
